<compile_context>
chip_gen: v5e
topology: v5e:2x2
jax: 0.10.0
libtpu: 0.0.40
codegen_flags: <defaults>
</compile_context>

<pallas_src>
import jax
import jax.numpy as jnp
from jax.experimental import pallas as pl
from jax.experimental.pallas import tpu as pltpu


def _replicator_seq_kernel(x_ref, w_ref, st_ref, o_ref):
    """One grid step: NB batch slabs.

    x_ref : (NB, E, S)  input block
    w_ref : (E, E)      embedding_weight (VMEM-resident across grid steps)
    st_ref: (S, S)      seq_weight^T (causal mask already applied in wrapper)
    o_ref : (NB, E, S)  output block
    """
    w = w_ref[...]
    st = st_ref[...]
    nb = x_ref.shape[0]
    low_precision = jnp.dtype(x_ref.dtype) != jnp.dtype(jnp.float32)

    # Static (unrolled) loop of plain 2-D MXU matmuls per batch slab — no
    # broadcast of W into (NB, E, E); W is held and reused across slabs.
    for b in range(nb):
        xb = x_ref[b]                                                   # (E, S)
        # xe[f, s] = sum_e W[f, e] * x[e, s]
        xe = jnp.dot(w, xb, preferred_element_type=jnp.float32)        # (E, S) f32
        # Keep the MXU on its native low-precision path when input is bf16/etc.
        lhs = xe.astype(x_ref.dtype) if low_precision else xe
        # fit[f, s] = sum_t xe[f, t] * seq_w[s, t]  ==  xe @ seq_w^T
        fit = jnp.dot(lhs, st, preferred_element_type=jnp.float32)     # (E, S) f32

        xf = xb.astype(jnp.float32)                                     # epilogue in f32
        avg = jnp.sum(xf * fit, axis=-1, keepdims=True)                 # (E, 1): sum over S
        out = xf * (fit - avg + 1.0)                                    # x + x*(fit - avg)
        o_ref[b] = jnp.maximum(out, 0.0).astype(o_ref.dtype)            # relu


def _vmem_capacity_bytes(default_bytes=64 * 1024 * 1024):
    """Physical VMEM of the attached TPU generation, with a safe fallback."""
    try:
        info = pltpu.get_tpu_info()
        cap = int(getattr(info, "vmem_capacity_bytes", default_bytes))
        return cap if cap > 0 else default_bytes
    except Exception:
        return default_bytes


def replicator_seq_layer(x, embedding_weight, seq_weight, *, mask=False,
                         batch_block=None):
    """x: (B, E, S); embedding_weight: (E, E); seq_weight: (S, S) -> (B, E, S)."""
    B, E, S = x.shape
    itemsize = jnp.dtype(x.dtype).itemsize

    # Parameter preprocessing (tiny, once, outside the kernel): apply the causal
    # mask and pre-transpose so the in-kernel seq mix is xe @ seq_w^T with no
    # in-kernel transpose.
    if mask:
        tri = jnp.triu(jnp.ones((S, S), dtype=bool), k=1)
        seq_weight = jnp.where(tri, jnp.zeros((), seq_weight.dtype), seq_weight)
    seq_weight_t = seq_weight.T

    # Generation-aware VMEM budgets (v7x: 64 MiB physical, v5e/v6e: 128 MiB).
    vmem_cap = _vmem_capacity_bytes()
    vmem_limit = int(min(0.85 * vmem_cap, 100 * 1024 * 1024))
    ws_budget = int(0.40 * vmem_cap)          # ~25 MiB on v7x, ~51 MiB on v5e/v6e

    if batch_block is None:
        # True live bytes per batch slab: double-buffered in + out blocks plus
        # the f32 intermediates (xe, fit, xf) the kernel keeps live.
        per_slab = 4 * E * S * itemsize + 3 * E * S * 4
        # Resident weights; conservatively budget both as double-buffered.
        weight_bytes = 2 * (E * E + S * S) * itemsize
        budget = max(ws_budget - weight_bytes, per_slab)
        batch_block = max(1, budget // per_slab)
        batch_block = min(batch_block, 32)            # bound kernel unrolling
        if B >= 2:
            # Keep grid length >= 2 so the "parallel" batch axis shards across
            # both v7x TensorCores (negligible extra step cost elsewhere).
            batch_block = min(batch_block, pl.cdiv(B, 2))
    batch_block = int(max(1, min(B, batch_block)))
    grid = (pl.cdiv(B, batch_block),)

    flops = 2 * B * E * E * S + 2 * B * E * S * S + 6 * B * E * S
    bytes_accessed = 2 * B * E * S * itemsize + (E * E + S * S) * itemsize

    return pl.pallas_call(
        _replicator_seq_kernel,
        out_shape=jax.ShapeDtypeStruct((B, E, S), x.dtype),
        grid=grid,
        in_specs=[
            pl.BlockSpec((batch_block, E, S), lambda i: (i, 0, 0)),
            # Constant block index -> weights stay VMEM-resident across steps.
            pl.BlockSpec((E, E), lambda i: (0, 0)),
            pl.BlockSpec((S, S), lambda i: (0, 0)),
        ],
        out_specs=pl.BlockSpec((batch_block, E, S), lambda i: (i, 0, 0)),
        compiler_params=pltpu.CompilerParams(
            dimension_semantics=("parallel",),
            vmem_limit_bytes=vmem_limit,
        ),
        cost_estimate=pl.CostEstimate(
            flops=flops, transcendentals=0, bytes_accessed=bytes_accessed),
    )(x, embedding_weight, seq_weight_t)


def _reference(x, embedding_weight, seq_weight, mask=False):
    """Pure-JAX mirror of the PyTorch forward."""
    xe = jnp.einsum('bes,fe->bfs', x, embedding_weight)
    if mask:
        tri = jnp.triu(jnp.ones(seq_weight.shape, dtype=bool), k=1)
        seq_weight = jnp.where(tri, 0.0, seq_weight)
    fit = jnp.einsum('st,bet->bes', seq_weight, xe)
    avg = jnp.einsum('bes,bes->be', x, fit)[..., None]
    x_next = x + x * (fit - avg)
    return jnp.maximum(x_next, 0.0)


if __name__ == "__main__":
    key = jax.random.PRNGKey(0)
    k1, k2, k3 = jax.random.split(key, 3)

    B, E, S = 2, 32, 8  # batch, embedding_size, seq_len

    # xavier_uniform-style bounds for the two square weights
    bound_e = (6.0 / (E + E)) ** 0.5
    bound_s = (6.0 / (S + S)) ** 0.5
    embedding_weight = jax.random.uniform(k1, (E, E), jnp.float32,
                                          minval=-bound_e, maxval=bound_e)
    seq_weight = jax.random.uniform(k2, (S, S), jnp.float32,
                                    minval=-bound_s, maxval=bound_s)
    x = jax.random.uniform(k3, (B, E, S), dtype=jnp.float32)

    for use_mask in (False, True):
        out = replicator_seq_layer(x, embedding_weight, seq_weight,
                                   mask=use_mask)
        out = jax.block_until_ready(out)
        ref = _reference(x, embedding_weight, seq_weight, mask=use_mask)
        assert out.shape == (B, E, S)
        assert jnp.allclose(out, ref, atol=1e-5, rtol=1e-5), \
            f"mismatch (mask={use_mask})"

    print("KERNEL_OK")
</pallas_src>

<mosaic_0001>
module attributes {stable_mosaic.version = 11 : i64} {
  func.func @_replicator_seq_kernel(%arg0: i32, %arg1: memref<1x32x8xf32, #tpu.memory_space<vmem>>, %arg2: memref<32x32xf32, #tpu.memory_space<vmem>>, %arg3: memref<8x8xf32, #tpu.memory_space<vmem>>, %arg4: memref<1x32x8xf32, #tpu.memory_space<vmem>>) attributes {dimension_semantics = [#tpu.dimension_semantics<parallel>], iteration_bounds = array<i64: 2>, scalar_prefetch = 0 : i64, scratch_operands = 0 : i64, tpu.core_type = #tpu.core_type<tc>, window_params = [{transform_indices = @transform_0, window_bounds = array<i64: 1, 32, 8>}, {pipeline_mode = #tpu.pipeline_mode<synchronous>, transform_indices = @transform_1, window_bounds = array<i64: 32, 32>}, {pipeline_mode = #tpu.pipeline_mode<synchronous>, transform_indices = @transform_2, window_bounds = array<i64: 8, 8>}, {transform_indices = @transform_3, window_bounds = array<i64: 1, 32, 8>}]} {
    %c0 = arith.constant 0 : index
    %c0_0 = arith.constant 0 : index
    %0 = vector.load %arg2[%c0, %c0_0] : memref<32x32xf32, #tpu.memory_space<vmem>>, vector<32x32xf32>
    %c0_1 = arith.constant 0 : index
    %c0_2 = arith.constant 0 : index
    %1 = vector.load %arg3[%c0_1, %c0_2] : memref<8x8xf32, #tpu.memory_space<vmem>>, vector<8x8xf32>
    %c0_3 = arith.constant 0 : index
    %c0_4 = arith.constant 0 : index
    %c0_5 = arith.constant 0 : index
    %2 = vector.load %arg1[%c0_3, %c0_4, %c0_5] : memref<1x32x8xf32, #tpu.memory_space<vmem>>, vector<1x32x8xf32>
    %3 = vector.shape_cast %2 : vector<1x32x8xf32> to vector<32x8xf32>
    %cst = arith.constant dense<0.000000e+00> : vector<32x8xf32>
    %4 = tpu.matmul %0, %3, %cst {dimension_numbers = #tpu.dot_dimension_numbers<[1], [0], [0], [1], [0, 0, 1, 1], [], []>} : vector<32x32xf32>, vector<32x8xf32>, vector<32x8xf32> -> vector<32x8xf32>
    %cst_6 = arith.constant dense<0.000000e+00> : vector<32x8xf32>
    %5 = tpu.matmul %4, %1, %cst_6 {dimension_numbers = #tpu.dot_dimension_numbers<[1], [0], [0], [1], [0, 0, 1, 1], [], []>} : vector<32x8xf32>, vector<8x8xf32>, vector<32x8xf32> -> vector<32x8xf32>
    %6 = arith.mulf %3, %5 : vector<32x8xf32>
    %cst_7 = arith.constant dense<0.000000e+00> : vector<32xf32>
    %7 = vector.multi_reduction <add>, %6, %cst_7 [1] : vector<32x8xf32> to vector<32xf32>
    %8 = vector.shape_cast %7 : vector<32xf32> to vector<32x1xf32>
    %9 = vector.broadcast %8 : vector<32x1xf32> to vector<32x8xf32>
    %10 = arith.subf %5, %9 : vector<32x8xf32>
    %cst_8 = arith.constant 1.000000e+00 : f32
    %11 = vector.broadcast %cst_8 : f32 to vector<32x8xf32>
    %12 = arith.addf %10, %11 : vector<32x8xf32>
    %13 = arith.mulf %3, %12 : vector<32x8xf32>
    %cst_9 = arith.constant 0.000000e+00 : f32
    %14 = vector.broadcast %cst_9 : f32 to vector<32x8xf32>
    %15 = arith.maximumf %13, %14 : vector<32x8xf32>
    %c0_10 = arith.constant 0 : index
    %c0_11 = arith.constant 0 : index
    %c0_12 = arith.constant 0 : index
    %16 = vector.load %arg4[%c0_10, %c0_11, %c0_12] : memref<1x32x8xf32, #tpu.memory_space<vmem>>, vector<1x32x8xf32>
    %17 = vector.shape_cast %16 : vector<1x32x8xf32> to vector<32x8xf32>
    %18 = vector.shape_cast %15 : vector<32x8xf32> to vector<1x32x8xf32>
    tpu.vector_store %arg4[%c0_10, %c0_11, %c0_12], %18 {strides = array<i32>} : memref<1x32x8xf32, #tpu.memory_space<vmem>>, vector<1x32x8xf32>,
    return
  }
  func.func @transform_0(%arg0: i32) -> (i32, i32, i32) {
    %c0_i32 = arith.constant 0 : i32
    %c0_i32_0 = arith.constant 0 : i32
    %c0_i32_1 = arith.constant 0 : i32
    return %arg0, %c0_i32, %c0_i32_0 : i32, i32, i32
  }
  func.func @transform_1(%arg0: i32) -> (i32, i32) {
    %c0_i32 = arith.constant 0 : i32
    %c0_i32_0 = arith.constant 0 : i32
    %c0_i32_1 = arith.constant 0 : i32
    return %c0_i32, %c0_i32_0 : i32, i32
  }
  func.func @transform_2(%arg0: i32) -> (i32, i32) {
    %c0_i32 = arith.constant 0 : i32
    %c0_i32_0 = arith.constant 0 : i32
    %c0_i32_1 = arith.constant 0 : i32
    return %c0_i32, %c0_i32_0 : i32, i32
  }
  func.func @transform_3(%arg0: i32) -> (i32, i32, i32) {
    %c0_i32 = arith.constant 0 : i32
    %c0_i32_0 = arith.constant 0 : i32
    %c0_i32_1 = arith.constant 0 : i32
    return %arg0, %c0_i32, %c0_i32_0 : i32, i32, i32
  }
}

</mosaic_0001>

<llo_original>
// kernel: tpu_custom_call.1
$region0: #{tpu_custom_call.1}
  #allocation0 [shape = 'u32[]', space=smem, size = 0x4, offset = 0x4, fixed_abs, tag = 'smem constant byte address 0x4 - core index']
  #allocation1 [shape = 'u32[72,128]{1,0:T(1,128)}', space=vmem, size = 0x9000, scoped, tag = 'internal scratch']
  %s0 = inlined_call_operand.vmem [shape: f32[2,32,8], index: 0, kind: input, shape index: {}]
  %s1 = inlined_call_operand.vmem [shape: f32[32,32], index: 1, kind: input, shape index: {}]
  %s2 = inlined_call_operand.vmem [shape: f32[8,8], index: 2, kind: input, shape index: {}]
  %s3 = inlined_call_operand.vmem [shape: f32[2,32,8], index: 3, kind: output, shape index: {}]
  %s4 = sld [smem:[#allocation0]]
  $region45: #{tpu_custom_call.1} parent=0
    _
  %s6 = ssub.s32 1, %s4
  %s7 = scalar_select 0, %s6, %s4
  loop: start=0, step=1, limit=4
  $region2: #{tpu_custom_call.1} parent=0 // loop_pre_header
    _
  $region3: #{tpu_custom_call.1} parent=0 // loop_header
    %s9 = sphi 0, %s13
    %p10 = scmp.ge.s32.totalorder %s9, 4
    %s19 = sphi 0, %s21
    %s22 = sphi 0, %s19
    %s23 = sphi 0, %s22
    %s39 = sphi 0, %s23
    %s43 = sphi 0, %s43
    %s45 = sphi 0, %s43
    %s46 = sphi 0, %s45
    %s60 = sphi 0, %s46
    %s64 = sphi 0, %s64
    %s66 = sphi 0, %s64
    %s67 = sphi 0, %s66
    %s81 = sphi 0, %s67
    %s87 = sphi 0, %s89
    %s90 = sphi 0, %s87
    %s91 = sphi 0, %s90
    %s107 = sphi 0, %s91
  $region4: #{tpu_custom_call.1} parent=0 // loop_header_branch
    %12 = sbr.rel (%p10) target = $region8
  $region5: #{tpu_custom_call.1} parent=0 // loop_body
    %s14 = ssub.s32 %s9, 1
    %s15 = ssub.s32 %s9, 2
    %s16 = sadd.s32 %s9, 1
    %s17 = ssub.s32 %s9, %s16
    %p18 = scmp.eq.s32.totalorder %s17, 0
    %s20 = sadd.s32 %s19, 1
    %s21 = scalar_select %p18, %s19, %s20
    %p24 = pneg %p18
    %p25 = scmp.eq.s32.totalorder %s9, 1
    %p26 = por %p24, %p25
    %p27 = scmp.ne.s32.totalorder %s19, %s22
    %p28 = scmp.eq.s32.totalorder %s9, 0
    %p29 = por %p27, %p28
    %p30 = scmp.ne.s32.totalorder %s19, %s22
    %p31 = scmp.eq.s32.totalorder %s14, 1
    %p32 = por %p30, %p31
    %p33 = scmp.ne.s32.totalorder %s22, %s23
    %p34 = scmp.eq.s32.totalorder %s14, 0
    %p35 = por %p33, %p34
    %p36 = scmp.ne.s32.totalorder %s22, %s23
    %p37 = scmp.eq.s32.totalorder %s15, 1
    %p38 = por %p36, %p37
    %p40 = scmp.ne.s32.totalorder %s23, %s39
    %p41 = scmp.eq.s32.totalorder %s15, 0
    %p42 = por %p40, %p41
    %s44 = sadd.s32 %s43, 1
    %p47 = scmp.eq.s32.totalorder %s9, 1
    %p48 = scmp.ne.s32.totalorder %s43, %s45
    %p49 = scmp.eq.s32.totalorder %s9, 0
    %p50 = por %p48, %p49
    %p51 = scmp.ne.s32.totalorder %s43, %s45
    %p52 = scmp.eq.s32.totalorder %s14, 1
    %p53 = por %p51, %p52
    %p54 = scmp.ne.s32.totalorder %s45, %s46
    %p55 = scmp.eq.s32.totalorder %s14, 0
    %p56 = por %p54, %p55
    %p57 = scmp.ne.s32.totalorder %s45, %s46
    %p58 = scmp.eq.s32.totalorder %s15, 1
    %p59 = por %p57, %p58
    %p61 = scmp.ne.s32.totalorder %s46, %s60
    %p62 = scmp.eq.s32.totalorder %s15, 0
    %p63 = por %p61, %p62
    %s65 = sadd.s32 %s64, 1
    %p68 = scmp.eq.s32.totalorder %s9, 1
    %p69 = scmp.ne.s32.totalorder %s64, %s66
    %p70 = scmp.eq.s32.totalorder %s9, 0
    %p71 = por %p69, %p70
    %p72 = scmp.ne.s32.totalorder %s64, %s66
    %p73 = scmp.eq.s32.totalorder %s14, 1
    %p74 = por %p72, %p73
    %p75 = scmp.ne.s32.totalorder %s66, %s67
    %p76 = scmp.eq.s32.totalorder %s14, 0
    %p77 = por %p75, %p76
    %p78 = scmp.ne.s32.totalorder %s66, %s67
    %p79 = scmp.eq.s32.totalorder %s15, 1
    %p80 = por %p78, %p79
    %p82 = scmp.ne.s32.totalorder %s67, %s81
    %p83 = scmp.eq.s32.totalorder %s15, 0
    %p84 = por %p82, %p83
    %s85 = ssub.s32 %s9, %s16
    %p86 = scmp.eq.s32.totalorder %s85, 0
    %s88 = sadd.s32 %s87, 1
    %s89 = scalar_select %p86, %s87, %s88
    %p92 = pneg %p86
    %p93 = scmp.eq.s32.totalorder %s9, 1
    %p94 = por %p92, %p93
    %p95 = scmp.ne.s32.totalorder %s87, %s90
    %p96 = scmp.eq.s32.totalorder %s9, 0
    %p97 = por %p95, %p96
    %p98 = scmp.ne.s32.totalorder %s87, %s90
    %p99 = scmp.eq.s32.totalorder %s14, 1
    %p100 = por %p98, %p99
    %p101 = scmp.ne.s32.totalorder %s90, %s91
    %p102 = scmp.eq.s32.totalorder %s14, 0
    %p103 = por %p101, %p102
    %p104 = scmp.ne.s32.totalorder %s90, %s91
    %p105 = scmp.eq.s32.totalorder %s15, 1
    %p106 = por %p104, %p105
    %p108 = scmp.ne.s32.totalorder %s91, %s107
    %p109 = scmp.eq.s32.totalorder %s15, 0
    %p110 = por %p108, %p109
    %p111 = scmp.le.s32.totalorder 1, %s9
    %p112 = scmp.lt.s32.totalorder %s9, 3
    %p113 = pnand %p111, %p112
    %p114 = pneg %p113
    // Predicated region
    $region9: #{tpu_custom_call.1} parent=5 // pred_check
      _
    $region10: #{tpu_custom_call.1} parent=5 // pred_check_branch
      %116 = sbr.rel (%p113) target = $region12
    $region11: #{tpu_custom_call.1} parent=5 // pred_region
      %s117 = ssub.s32 %s9, 1
      // Predicated region
      $region13: #{tpu_custom_call.1} parent=11 // pred_check
        %p118 = pneg %p56
      $region14: #{tpu_custom_call.1} parent=11 // pred_check_branch
        %120 = sbr.rel (%p118) target = $region16
      $region15: #{tpu_custom_call.1} parent=11 // pred_region
        _
      $region16: #{tpu_custom_call.1} parent=11 // pred_fallthru
        _
      // Predicated region
      $region17: #{tpu_custom_call.1} parent=11 // pred_check
        %p121 = pneg %p77
      $region18: #{tpu_custom_call.1} parent=11 // pred_check_branch
        %123 = sbr.rel (%p121) target = $region20
      $region19: #{tpu_custom_call.1} parent=11 // pred_region
        _
      $region20: #{tpu_custom_call.1} parent=11 // pred_fallthru
        _
    $region12: #{tpu_custom_call.1} parent=5 // pred_fallthru
      _
    %p124 = scmp.lt.s32.totalorder %s9, 2
    // Predicated region
    $region21: #{tpu_custom_call.1} parent=5 // pred_check
      %p125 = pneg %p124
    $region22: #{tpu_custom_call.1} parent=5 // pred_check_branch
      %127 = sbr.rel (%p125) target = $region24
    $region23: #{tpu_custom_call.1} parent=5 // pred_region
      // Predicated region
      $region25: #{tpu_custom_call.1} parent=23 // pred_check
        %p128 = pneg %p29
      $region26: #{tpu_custom_call.1} parent=23 // pred_check_branch
        %130 = sbr.rel (%p128) target = $region28
      $region27: #{tpu_custom_call.1} parent=23 // pred_region
        %p131 = scmp.lt.s32.totalorder %s9, 1
        %s132 = scalar_select %p131, %s9, 1
        %s133 = smul.addr %s132, 4
        %s134 = smul.addr %s133, 8
        %s135 = scalar_lea.vmem %s0, %s134
      $region28: #{tpu_custom_call.1} parent=23 // pred_fallthru
        _
    $region24: #{tpu_custom_call.1} parent=5 // pred_fallthru
      _
    %p136 = scmp.le.s32.totalorder 1, %s9
    %p137 = scmp.lt.s32.totalorder %s9, 3
    %p138 = pnand %p136, %p137
    %p139 = pneg %p138
    // Predicated region
    $region29: #{tpu_custom_call.1} parent=5 // pred_check
      _
    $region30: #{tpu_custom_call.1} parent=5 // pred_check_branch
      %141 = sbr.rel (%p138) target = $region32
    $region31: #{tpu_custom_call.1} parent=5 // pred_region
      %s142 = ssub.s32 %s9, 1
      %p143 = scmp.lt.s32.totalorder %s14, 1
      %s144 = scalar_select %p143, %s14, 1
      %s145 = smul.addr %s144, 4
      %s146 = smul.addr %s145, 8
      %s147 = scalar_lea.vmem %s0, %s146
      %p148 = pneg %p35
      %p149 = pneg %p32
      %p150 = pneg %p56
      %p151 = pneg %p53
      %p152 = pneg %p77
      %p153 = pneg %p74
      %p154 = pneg %p103
      %p155 = pneg %p100
      %p156 = scmp.lt.s32.totalorder %s14, 1
      %s157 = scalar_select %p156, %s14, 1
      %s158 = smul.addr %s157, 4
      %s159 = smul.addr %s158, 8
      %s160 = scalar_lea.vmem %s3, %s159
      %p161 = scmp.lt.s32.totalorder %s14, 1
      %s162 = scalar_select %p161, %s14, 1
      %s163 = smul.addr %s162, 4
      %s164 = smul.addr %s163, 8
      %s165 = scalar_lea.vmem %s0, %s164
      %p166 = scmp.lt.s32.totalorder %s14, 1
      %s167 = scalar_select %p166, %s14, 1
      %s168 = smul.addr %s167, 4
      %s169 = smul.addr %s168, 8
      %s170 = scalar_lea.vmem %s3, %s169
      %v171 = vld [vmem:[%s1] sm:$0xff]
      %v172 = vld [vmem:[%s1 + $0x8] sm:$0xff]
      %v173 = vld [vmem:[%s1 + $0x10] sm:$0xff]
      %v174 = vld [vmem:[%s1 + $0x18] sm:$0xff]
      %v175 = vld [vmem:[%s2] sm:$0xff]
      %v176 = vld [vmem:[%s165] sm:$0xff]
      %v177 = vld [vmem:[%s165 + $0x8] sm:$0xff]
      %v178 = vld [vmem:[%s165 + $0x10] sm:$0xff]
      %v179 = vld [vmem:[%s165 + $0x18] sm:$0xff]
      %vm180 = vcmask 261120
      %v182 = vsel %vm180, %v171, 0
      %v185 = vsel %vm180, %v172, 0
      %v188 = vsel %vm180, %v173, 0
      %v191 = vsel %vm180, %v174, 0
      %193 = vmatpush.msra.mxu0 0.0
      %194 = vmatpush.msra.mxu0 0.0
      %195 = vmatpush.msra.mxu0 0.0
      %196 = vmatpush.msra.mxu0 0.0
      %197 = vmatpush.msra.mxu0 0.0
      %198 = vmatpush.msra.mxu0 0.0
      %199 = vmatpush.msra.mxu0 0.0
      %200 = vmatpush.msra.mxu0 0.0
      %201 = vmatpush.msra.mxu0 0.0
      %202 = vmatpush.msra.mxu0 0.0
      %203 = vmatpush.msra.mxu0 0.0
      %204 = vmatpush.msra.mxu0 0.0
      %205 = vmatpush.msra.mxu0 %v179
      %206 = vmatpush.msra.mxu0 %v178
      %207 = vmatpush.msra.mxu0 %v177
      %208 = vmatpush.msra.mxu0 %v176
      %209 = vmatmul.f32.gmra.mxu0 %v182
      %v210 = vpop.f32.mrf.mxu0
      %v211 = vadd.f32 0.0, %v210
      %212 = vmatmul.f32.gmra.mxu0 %v185
      %v213 = vpop.f32.mrf.mxu0
      %v214 = vadd.f32 0.0, %v213
      %215 = vmatmul.f32.gmra.mxu0 %v188
      %v216 = vpop.f32.mrf.mxu0
      %v217 = vadd.f32 0.0, %v216
      %218 = vmatmul.f32.gmra.mxu0 %v191
      %v219 = vpop.f32.mrf.mxu0
      %v220 = vadd.f32 0.0, %v219
      %221 = vdwg.mxu0
      %vm222 = vcmask 64512
      %v224 = vsel %vm222, %v211, 0
      %v227 = vsel %vm222, %v214, 0
      %v230 = vsel %vm222, %v217, 0
      %v233 = vsel %vm222, %v220, 0
      %235 = vmatpush.msra.mxu0 0.0
      %236 = vmatpush.msra.mxu0 0.0
      %237 = vmatpush.msra.mxu0 0.0
      %238 = vmatpush.msra.mxu0 0.0
      %239 = vmatpush.msra.mxu0 0.0
      %240 = vmatpush.msra.mxu0 0.0
      %241 = vmatpush.msra.mxu0 0.0
      %242 = vmatpush.msra.mxu0 0.0
      %243 = vmatpush.msra.mxu0 0.0
      %244 = vmatpush.msra.mxu0 0.0
      %245 = vmatpush.msra.mxu0 0.0
      %246 = vmatpush.msra.mxu0 0.0
      %247 = vmatpush.msra.mxu0 0.0
      %248 = vmatpush.msra.mxu0 0.0
      %249 = vmatpush.msra.mxu0 0.0
      %250 = vmatpush.msra.mxu0 %v175
      %251 = vmatmul.f32.gmra.mxu0 %v224
      %v252 = vpop.f32.mrf.mxu0
      %v253 = vadd.f32 0.0, %v252
      %254 = vmatmul.f32.gmra.mxu0 %v227
      %v255 = vpop.f32.mrf.mxu0
      %v256 = vadd.f32 0.0, %v255
      %257 = vmatmul.f32.gmra.mxu0 %v230
      %v258 = vpop.f32.mrf.mxu0
      %v259 = vadd.f32 0.0, %v258
      %260 = vmatmul.f32.gmra.mxu0 %v233
      %v261 = vpop.f32.mrf.mxu0
      %v262 = vadd.f32 0.0, %v261
      %263 = vdwg.mxu0
      %v264 = vmul.f32 %v176, %v253
      %v265 = vmul.f32 %v177, %v256
      %v266 = vmul.f32 %v178, %v259
      %v267 = vmul.f32 %v179, %v262
      %v268 = vsel %vm222, %v264, 0.0
      %269 = vadd.xlane.f32.xlu0 %v268
      %v270 = vpop.xlane.xlu0 %269
      %v271 = vsel %vm222, %v265, 0.0
      %272 = vadd.xlane.f32.xlu0 %v271
      %v273 = vpop.xlane.xlu0 %272
      %v274 = vsel %vm222, %v266, 0.0
      %275 = vadd.xlane.f32.xlu0 %v274
      %v276 = vpop.xlane.xlu0 %275
      %v277 = vsel %vm222, %v267, 0.0
      %278 = vadd.xlane.f32.xlu0 %v277
      %v279 = vpop.xlane.xlu0 %278
      %v280 = vsub.f32 %v253, %v270
      %v281 = vsub.f32 %v256, %v273
      %v282 = vsub.f32 %v259, %v276
      %v283 = vsub.f32 %v262, %v279
      %v284 = vadd.f32 %v280, 1.0
      %v285 = vadd.f32 %v281, 1.0
      %v286 = vadd.f32 %v282, 1.0
      %v287 = vadd.f32 %v283, 1.0
      %v288 = vmul.f32 %v176, %v284
      %v289 = vmul.f32 %v177, %v285
      %v290 = vmul.f32 %v178, %v286
      %v291 = vmul.f32 %v179, %v287
      %v292 = vmax.f32 %v288, 0.0
      %v293 = vmax.f32 %v289, 0.0
      %v294 = vmax.f32 %v290, 0.0
      %v295 = vmax.f32 %v291, 0.0
      %296 = vst.msk [vmem:[%s170] sm:$0xff] %vm222, %v292
      %297 = vst.msk [vmem:[%s170 + $0x8] sm:$0xff] %vm222, %v293
      %298 = vst.msk [vmem:[%s170 + $0x10] sm:$0xff] %vm222, %v294
      %299 = vst.msk [vmem:[%s170 + $0x18] sm:$0xff] %vm222, %v295
      %p300 = scmp.lt.s32.totalorder %s14, 1
      %s301 = scalar_select %p300, %s14, 1
      %s302 = smul.addr %s301, 4
      %s303 = smul.addr %s302, 8
      %s304 = scalar_lea.vmem %s3, %s303
      // Predicated region
      $region33: #{tpu_custom_call.1} parent=31 // pred_check
        %p305 = pneg %p100
      $region34: #{tpu_custom_call.1} parent=31 // pred_check_branch
        %307 = sbr.rel (%p305) target = $region36
      $region35: #{tpu_custom_call.1} parent=31 // pred_region
        _
      $region36: #{tpu_custom_call.1} parent=31 // pred_fallthru
        _
    $region32: #{tpu_custom_call.1} parent=5 // pred_fallthru
      _
    %p308 = scmp.le.s32.totalorder 2, %s9
    // Predicated region
    $region37: #{tpu_custom_call.1} parent=5 // pred_check
      %p309 = pneg %p308
    $region38: #{tpu_custom_call.1} parent=5 // pred_check_branch
      %311 = sbr.rel (%p309) target = $region40
    $region39: #{tpu_custom_call.1} parent=5 // pred_region
      %s312 = ssub.s32 %s9, 2
      // Predicated region
      $region41: #{tpu_custom_call.1} parent=39 // pred_check
        %p313 = pneg %p106
      $region42: #{tpu_custom_call.1} parent=39 // pred_check_branch
        %315 = sbr.rel (%p313) target = $region44
      $region43: #{tpu_custom_call.1} parent=39 // pred_region
        %p316 = scmp.lt.s32.totalorder %s15, 1
        %s317 = scalar_select %p316, %s15, 1
        %s318 = smul.addr %s317, 4
        %s319 = smul.addr %s318, 8
        %s320 = scalar_lea.vmem %s3, %s319
      $region44: #{tpu_custom_call.1} parent=39 // pred_fallthru
        _
    $region40: #{tpu_custom_call.1} parent=5 // pred_fallthru
      _
  $region6: #{tpu_custom_call.1} parent=0 // loop_footer
    %s13 = sadd.s32 1, %s9
  $region7: #{tpu_custom_call.1} parent=0 // loop_footer_branch
    %8 = sbr.rel target = $region3
  $region8: #{tpu_custom_call.1} parent=0 // loop_exit
    _

</llo_original>
